<compile_context>
chip_gen: v5e
topology: v5e:2x2
jax: 0.10.0
libtpu: 0.0.40
codegen_flags: <defaults>
</compile_context>

<pallas_src>
import functools

import jax
import jax.numpy as jnp
from jax.experimental import pallas as pl
from jax.experimental.pallas import tpu as pltpu

N = 2            # batch
C = 4            # channels
H = W = 16       # spatial
D = C * H * W    # flattened feature dim = 1024
HIDDEN = 32
CLASSES = 10
OUT_PAD = 128    # lane-dense padded output width
SUBLANE = 8


def _round_up(x, m):
    return (x + m - 1) // m * m


def mlp_kernel(x_ref, w1_ref, b1_ref, w2_ref, b2_ref, o_ref):
    # Normalization already folded into w1/b1: just two MXU matmuls
    # (bf16 inputs, f32 accumulation) + bias + ReLU.
    x = x_ref[...].astype(jnp.bfloat16)
    h = jnp.dot(x, w1_ref[...], preferred_element_type=jnp.float32) + b1_ref[...]
    h = jnp.maximum(h, 0.0)
    out = jnp.dot(h.astype(jnp.bfloat16), w2_ref[...],
                  preferred_element_type=jnp.float32) + b2_ref[...]
    o_ref[...] = out.astype(o_ref.dtype)


def prepare_params(mean_c, std_c, w1, b1, w2, b2, *, c=C, hw=H * W):
    """One-time parameter prep (weights are static / reused across calls)."""
    d = c * hw
    mean_vec = jnp.broadcast_to(mean_c[:, None], (c, hw)).reshape(d)
    invstd_vec = jnp.broadcast_to((1.0 / std_c)[:, None], (c, hw)).reshape(d)

    # Fold normalization into the first linear layer.
    w1f = (w1 * invstd_vec[:, None]).astype(jnp.bfloat16)
    b1f = (b1 - (mean_vec * invstd_vec) @ w1).astype(jnp.float32).reshape(1, -1)

    # Lane-pad the narrow output head to 128.
    hidden, classes = w2.shape
    w2p = jnp.zeros((hidden, OUT_PAD), jnp.float32).at[:, :classes].set(w2)
    w2p = w2p.astype(jnp.bfloat16)
    b2p = jnp.zeros((1, OUT_PAD), jnp.float32).at[0, :classes].set(b2)
    return w1f, b1f, w2p, b2p


@functools.partial(jax.jit, static_argnames=("tile_m",))
def normalize_model(x_nchw, w1f, b1f, w2p, b2p, *, tile_m=128):
    """x_nchw: (N, C, H, W) float32. Returns (N, CLASSES) float32."""
    n, c, h, w = x_nchw.shape
    d = c * h * w
    x2 = x_nchw.reshape(n, d)                       # glue: row-major NCHW flatten

    # Batch tiling: >= 8 sublanes, <= tile_m rows per grid step; pad batch up.
    tm = min(tile_m, _round_up(n, SUBLANE))
    m_pad = _round_up(n, tm)
    if m_pad != n:
        x2 = jnp.pad(x2, ((0, m_pad - n), (0, 0)))

    hidden = w1f.shape[1]
    grid = (m_pad // tm,)

    cost = pl.CostEstimate(
        flops=2 * m_pad * d * hidden + 2 * m_pad * hidden * OUT_PAD,
        transcendentals=0,
        bytes_accessed=(x2.size * 4 + w1f.size * 2 + w2p.size * 2
                        + b1f.size * 4 + b2p.size * 4 + m_pad * OUT_PAD * 4),
    )

    out = pl.pallas_call(
        mlp_kernel,
        out_shape=jax.ShapeDtypeStruct((m_pad, OUT_PAD), jnp.float32),
        grid=grid,
        in_specs=[
            pl.BlockSpec((tm, d), lambda i: (i, 0)),        # batch-tiled input
            pl.BlockSpec(w1f.shape, lambda i: (0, 0)),      # resident weights
            pl.BlockSpec(b1f.shape, lambda i: (0, 0)),
            pl.BlockSpec(w2p.shape, lambda i: (0, 0)),
            pl.BlockSpec(b2p.shape, lambda i: (0, 0)),
        ],
        out_specs=pl.BlockSpec((tm, OUT_PAD), lambda i: (i, 0)),
        compiler_params=pltpu.CompilerParams(
            dimension_semantics=("parallel",)),             # megacore on v7x
        cost_estimate=cost,
    )(x2, w1f, b1f, w2p, b2p)

    return out[:n, :CLASSES]


def reference(x_nchw, mean_c, std_c, w1, b1, w2, b2):
    xn = (x_nchw - mean_c[None, :, None, None]) / std_c[None, :, None, None]
    x2 = xn.reshape(x_nchw.shape[0], -1)
    h = jnp.maximum(x2 @ w1 + b1, 0.0)
    return h @ w2 + b2


if __name__ == "__main__":
    key = jax.random.PRNGKey(0)
    kx, k1, k2 = jax.random.split(key, 3)

    # deterministic synthetic parameters (no checkpoint load)
    mean_c = jnp.array([0.485, 0.456, 0.406, 0.5], dtype=jnp.float32)
    std_c = jnp.array([0.229, 0.224, 0.225, 0.25], dtype=jnp.float32)
    w1 = jax.random.normal(k1, (D, HIDDEN), dtype=jnp.float32) * 0.02
    b1 = jnp.zeros((HIDDEN,), dtype=jnp.float32)
    w2 = jax.random.normal(k2, (HIDDEN, CLASSES), dtype=jnp.float32) * 0.02
    b2 = jnp.zeros((CLASSES,), dtype=jnp.float32)

    x = jax.random.uniform(kx, (N, C, H, W), dtype=jnp.float32)

    # one-time parameter prep (normalization fold + bf16 + lane padding)
    w1f, b1f, w2p, b2p = prepare_params(mean_c, std_c, w1, b1, w2, b2)

    out = normalize_model(x, w1f, b1f, w2p, b2p)
    out = jax.block_until_ready(out)

    ref = reference(x, mean_c, std_c, w1, b1, w2, b2)
    assert out.shape == (N, CLASSES)
    # bf16 weight path vs. pure-f32 reference -> relaxed tolerance
    assert jnp.allclose(out, ref, atol=2e-2, rtol=2e-2), "mismatch vs reference"

    print("KERNEL_OK")
</pallas_src>

<mosaic_0001>
module attributes {stable_mosaic.version = 11 : i64} {
  func.func @mlp_kernel(%arg0: i32, %arg1: memref<8x1024xf32, #tpu.memory_space<vmem>>, %arg2: memref<1024x32xbf16, #tpu.memory_space<vmem>>, %arg3: memref<1x32xf32, #tpu.memory_space<vmem>>, %arg4: memref<32x128xbf16, #tpu.memory_space<vmem>>, %arg5: memref<1x128xf32, #tpu.memory_space<vmem>>, %arg6: memref<8x128xf32, #tpu.memory_space<vmem>>) attributes {dimension_semantics = [#tpu.dimension_semantics<parallel>], iteration_bounds = array<i64: 1>, scalar_prefetch = 0 : i64, scratch_operands = 0 : i64, tpu.core_type = #tpu.core_type<tc>, window_params = [{transform_indices = @transform_0, window_bounds = array<i64: 8, 1024>}, {pipeline_mode = #tpu.pipeline_mode<synchronous>, transform_indices = @transform_1, window_bounds = array<i64: 1024, 32>}, {pipeline_mode = #tpu.pipeline_mode<synchronous>, transform_indices = @transform_2, window_bounds = array<i64: 1, 32>}, {pipeline_mode = #tpu.pipeline_mode<synchronous>, transform_indices = @transform_3, window_bounds = array<i64: 32, 128>}, {pipeline_mode = #tpu.pipeline_mode<synchronous>, transform_indices = @transform_4, window_bounds = array<i64: 1, 128>}, {transform_indices = @transform_5, window_bounds = array<i64: 8, 128>}]} {
    %c0 = arith.constant 0 : index
    %c0_0 = arith.constant 0 : index
    %0 = vector.load %arg1[%c0, %c0_0] : memref<8x1024xf32, #tpu.memory_space<vmem>>, vector<8x1024xf32>
    %1 = arith.truncf %0 : vector<8x1024xf32> to vector<8x1024xbf16>
    %c0_1 = arith.constant 0 : index
    %c0_2 = arith.constant 0 : index
    %2 = vector.load %arg2[%c0_1, %c0_2] : memref<1024x32xbf16, #tpu.memory_space<vmem>>, vector<1024x32xbf16>
    %cst = arith.constant dense<0.000000e+00> : vector<8x32xf32>
    %3 = tpu.matmul %1, %2, %cst {dimension_numbers = #tpu.dot_dimension_numbers<[1], [0], [0], [1], [0, 0, 1, 1], [], []>} : vector<8x1024xbf16>, vector<1024x32xbf16>, vector<8x32xf32> -> vector<8x32xf32>
    %c0_3 = arith.constant 0 : index
    %c0_4 = arith.constant 0 : index
    %4 = vector.load %arg3[%c0_3, %c0_4] : memref<1x32xf32, #tpu.memory_space<vmem>>, vector<1x32xf32>
    %5 = vector.broadcast %4 : vector<1x32xf32> to vector<8x32xf32>
    %6 = arith.addf %3, %5 : vector<8x32xf32>
    %cst_5 = arith.constant 0.000000e+00 : f32
    %7 = vector.broadcast %cst_5 : f32 to vector<8x32xf32>
    %8 = arith.maximumf %6, %7 : vector<8x32xf32>
    %9 = arith.truncf %8 : vector<8x32xf32> to vector<8x32xbf16>
    %c0_6 = arith.constant 0 : index
    %c0_7 = arith.constant 0 : index
    %10 = vector.load %arg4[%c0_6, %c0_7] : memref<32x128xbf16, #tpu.memory_space<vmem>>, vector<32x128xbf16>
    %cst_8 = arith.constant dense<0.000000e+00> : vector<8x128xf32>
    %11 = tpu.matmul %9, %10, %cst_8 {dimension_numbers = #tpu.dot_dimension_numbers<[1], [0], [0], [1], [0, 0, 1, 1], [], []>} : vector<8x32xbf16>, vector<32x128xbf16>, vector<8x128xf32> -> vector<8x128xf32>
    %c0_9 = arith.constant 0 : index
    %c0_10 = arith.constant 0 : index
    %12 = vector.load %arg5[%c0_9, %c0_10] : memref<1x128xf32, #tpu.memory_space<vmem>>, vector<1x128xf32>
    %13 = vector.broadcast %12 : vector<1x128xf32> to vector<8x128xf32>
    %14 = arith.addf %11, %13 : vector<8x128xf32>
    %c0_11 = arith.constant 0 : index
    %c0_12 = arith.constant 0 : index
    %15 = vector.load %arg6[%c0_11, %c0_12] : memref<8x128xf32, #tpu.memory_space<vmem>>, vector<8x128xf32>
    tpu.vector_store %arg6[%c0_11, %c0_12], %14 {strides = array<i32>} : memref<8x128xf32, #tpu.memory_space<vmem>>, vector<8x128xf32>,
    return
  }
  func.func @transform_0(%arg0: i32) -> (i32, i32) {
    %c0_i32 = arith.constant 0 : i32
    %c0_i32_0 = arith.constant 0 : i32
    return %arg0, %c0_i32 : i32, i32
  }
  func.func @transform_1(%arg0: i32) -> (i32, i32) {
    %c0_i32 = arith.constant 0 : i32
    %c0_i32_0 = arith.constant 0 : i32
    %c0_i32_1 = arith.constant 0 : i32
    return %c0_i32, %c0_i32_0 : i32, i32
  }
  func.func @transform_2(%arg0: i32) -> (i32, i32) {
    %c0_i32 = arith.constant 0 : i32
    %c0_i32_0 = arith.constant 0 : i32
    %c0_i32_1 = arith.constant 0 : i32
    return %c0_i32, %c0_i32_0 : i32, i32
  }
  func.func @transform_3(%arg0: i32) -> (i32, i32) {
    %c0_i32 = arith.constant 0 : i32
    %c0_i32_0 = arith.constant 0 : i32
    %c0_i32_1 = arith.constant 0 : i32
    return %c0_i32, %c0_i32_0 : i32, i32
  }
  func.func @transform_4(%arg0: i32) -> (i32, i32) {
    %c0_i32 = arith.constant 0 : i32
    %c0_i32_0 = arith.constant 0 : i32
    %c0_i32_1 = arith.constant 0 : i32
    return %c0_i32, %c0_i32_0 : i32, i32
  }
  func.func @transform_5(%arg0: i32) -> (i32, i32) {
    %c0_i32 = arith.constant 0 : i32
    %c0_i32_0 = arith.constant 0 : i32
    return %arg0, %c0_i32 : i32, i32
  }
}

</mosaic_0001>

<llo_original>
// kernel: normalize_model.1
$region0: #{normalize_model.1}
  #allocation0 [shape = 'u32[]', space=smem, size = 0x4, offset = 0x4, fixed_abs, tag = 'smem constant byte address 0x4 - core index']
  #allocation1 [shape = 'u32[72,128]{1,0:T(1,128)}', space=vmem, size = 0x9000, scoped, tag = 'internal scratch']
  %s0 = inlined_call_operand.vmem [shape: f32[8,1024], index: 0, kind: input, shape index: {}]
  %s1 = inlined_call_operand.vmem [shape: bf16[1024,32], index: 1, kind: input, shape index: {}]
  %s2 = inlined_call_operand.vmem [shape: f32[1,32], index: 2, kind: input, shape index: {}]
  %s3 = inlined_call_operand.vmem [shape: bf16[32,128], index: 3, kind: input, shape index: {}]
  %s4 = inlined_call_operand.vmem [shape: f32[1,128], index: 4, kind: input, shape index: {}]
  %s5 = inlined_call_operand.vmem [shape: f32[8,128], index: 5, kind: output, shape index: {}]
  %s6 = sld [smem:[#allocation0]]
  $region30: #{normalize_model.1} parent=0
    _
  %s8 = ssub.s32 1, %s6
  %s9 = scalar_select 0, %s8, %s6
  // Predicated region
  $region2: #{normalize_model.1} parent=0 // pred_check
    _
  $region3: #{normalize_model.1} parent=0 // pred_check_branch
    %11 = sbr.rel (0) target = $region5
  $region4: #{normalize_model.1} parent=0 // pred_region
    _
  $region5: #{normalize_model.1} parent=0 // pred_fallthru
    _
  // Predicated region
  $region6: #{normalize_model.1} parent=0 // pred_check
    _
  $region7: #{normalize_model.1} parent=0 // pred_check_branch
    %13 = sbr.rel (0) target = $region9
  $region8: #{normalize_model.1} parent=0 // pred_region
    _
  $region9: #{normalize_model.1} parent=0 // pred_fallthru
    _
  // Predicated region
  $region10: #{normalize_model.1} parent=0 // pred_check
    _
  $region11: #{normalize_model.1} parent=0 // pred_check_branch
    %15 = sbr.rel (0) target = $region13
  $region12: #{normalize_model.1} parent=0 // pred_region
    _
  $region13: #{normalize_model.1} parent=0 // pred_fallthru
    _
  // Predicated region
  $region14: #{normalize_model.1} parent=0 // pred_check
    _
  $region15: #{normalize_model.1} parent=0 // pred_check_branch
    %17 = sbr.rel (0) target = $region17
  $region16: #{normalize_model.1} parent=0 // pred_region
    _
  $region17: #{normalize_model.1} parent=0 // pred_fallthru
    _
  // Predicated region
  $region18: #{normalize_model.1} parent=0 // pred_check
    _
  $region19: #{normalize_model.1} parent=0 // pred_check_branch
    %19 = sbr.rel (0) target = $region21
  $region20: #{normalize_model.1} parent=0 // pred_region
    _
  $region21: #{normalize_model.1} parent=0 // pred_fallthru
    _
  %v21 = vld [vmem:[%s0] sm:$0xff]
  %v22 = vld [vmem:[%s0 + $0x8] sm:$0xff]
  %v23 = vld [vmem:[%s0 + $0x10] sm:$0xff]
  %v24 = vld [vmem:[%s0 + $0x18] sm:$0xff]
  %v25 = vld [vmem:[%s0 + $0x20] sm:$0xff]
  %v26 = vld [vmem:[%s0 + $0x28] sm:$0xff]
  %v27 = vld [vmem:[%s0 + $0x30] sm:$0xff]
  %v28 = vld [vmem:[%s0 + $0x38] sm:$0xff]
  %v29 = vpack.c.bf16 %v21, %v21
  %v30 = vpack.c.bf16 %v22, %v22
  %v31 = vpack.c.bf16 %v23, %v23
  %v32 = vpack.c.bf16 %v24, %v24
  %v33 = vpack.c.bf16 %v25, %v25
  %v34 = vpack.c.bf16 %v26, %v26
  %v35 = vpack.c.bf16 %v27, %v27
  %v36 = vpack.c.bf16 %v28, %v28
  %v37 = vld [vmem:[%s1] sm:$0xf]
  %v38 = vld [vmem:[%s1 + $0x4] sm:$0xf]
  %v39 = vld [vmem:[%s1 + $0x8] sm:$0xf]
  %v40 = vld [vmem:[%s1 + $0xc] sm:$0xf]
  %v41 = vld [vmem:[%s1 + $0x10] sm:$0xf]
  %v42 = vld [vmem:[%s1 + $0x14] sm:$0xf]
  %v43 = vld [vmem:[%s1 + $0x18] sm:$0xf]
  %v44 = vld [vmem:[%s1 + $0x1c] sm:$0xf]
  %v45 = vld [vmem:[%s1 + $0x20] sm:$0xf]
  %v46 = vld [vmem:[%s1 + $0x24] sm:$0xf]
  %v47 = vld [vmem:[%s1 + $0x28] sm:$0xf]
  %v48 = vld [vmem:[%s1 + $0x2c] sm:$0xf]
  %v49 = vld [vmem:[%s1 + $0x30] sm:$0xf]
  %v50 = vld [vmem:[%s1 + $0x34] sm:$0xf]
  %v51 = vld [vmem:[%s1 + $0x38] sm:$0xf]
  %v52 = vld [vmem:[%s1 + $0x3c] sm:$0xf]
  %v53 = vld [vmem:[%s1 + $0x40] sm:$0xf]
  %v54 = vld [vmem:[%s1 + $0x44] sm:$0xf]
  %v55 = vld [vmem:[%s1 + $0x48] sm:$0xf]
  %v56 = vld [vmem:[%s1 + $0x4c] sm:$0xf]
  %v57 = vld [vmem:[%s1 + $0x50] sm:$0xf]
  %v58 = vld [vmem:[%s1 + $0x54] sm:$0xf]
  %v59 = vld [vmem:[%s1 + $0x58] sm:$0xf]
  %v60 = vld [vmem:[%s1 + $0x5c] sm:$0xf]
  %v61 = vld [vmem:[%s1 + $0x60] sm:$0xf]
  %v62 = vld [vmem:[%s1 + $0x64] sm:$0xf]
  %v63 = vld [vmem:[%s1 + $0x68] sm:$0xf]
  %v64 = vld [vmem:[%s1 + $0x6c] sm:$0xf]
  %v65 = vld [vmem:[%s1 + $0x70] sm:$0xf]
  %v66 = vld [vmem:[%s1 + $0x74] sm:$0xf]
  %v67 = vld [vmem:[%s1 + $0x78] sm:$0xf]
  %v68 = vld [vmem:[%s1 + $0x7c] sm:$0xf]
  %v69 = vld [vmem:[%s1 + $0x80] sm:$0xf]
  %v70 = vld [vmem:[%s1 + $0x84] sm:$0xf]
  %v71 = vld [vmem:[%s1 + $0x88] sm:$0xf]
  %v72 = vld [vmem:[%s1 + $0x8c] sm:$0xf]
  %v73 = vld [vmem:[%s1 + $0x90] sm:$0xf]
  %v74 = vld [vmem:[%s1 + $0x94] sm:$0xf]
  %v75 = vld [vmem:[%s1 + $0x98] sm:$0xf]
  %v76 = vld [vmem:[%s1 + $0x9c] sm:$0xf]
  %v77 = vld [vmem:[%s1 + $0xa0] sm:$0xf]
  %v78 = vld [vmem:[%s1 + $0xa4] sm:$0xf]
  %v79 = vld [vmem:[%s1 + $0xa8] sm:$0xf]
  %v80 = vld [vmem:[%s1 + $0xac] sm:$0xf]
  %v81 = vld [vmem:[%s1 + $0xb0] sm:$0xf]
  %v82 = vld [vmem:[%s1 + $0xb4] sm:$0xf]
  %v83 = vld [vmem:[%s1 + $0xb8] sm:$0xf]
  %v84 = vld [vmem:[%s1 + $0xbc] sm:$0xf]
  %v85 = vld [vmem:[%s1 + $0xc0] sm:$0xf]
  %v86 = vld [vmem:[%s1 + $0xc4] sm:$0xf]
  %v87 = vld [vmem:[%s1 + $0xc8] sm:$0xf]
  %v88 = vld [vmem:[%s1 + $0xcc] sm:$0xf]
  %v89 = vld [vmem:[%s1 + $0xd0] sm:$0xf]
  %v90 = vld [vmem:[%s1 + $0xd4] sm:$0xf]
  %v91 = vld [vmem:[%s1 + $0xd8] sm:$0xf]
  %v92 = vld [vmem:[%s1 + $0xdc] sm:$0xf]
  %v93 = vld [vmem:[%s1 + $0xe0] sm:$0xf]
  %v94 = vld [vmem:[%s1 + $0xe4] sm:$0xf]
  %v95 = vld [vmem:[%s1 + $0xe8] sm:$0xf]
  %v96 = vld [vmem:[%s1 + $0xec] sm:$0xf]
  %v97 = vld [vmem:[%s1 + $0xf0] sm:$0xf]
  %v98 = vld [vmem:[%s1 + $0xf4] sm:$0xf]
  %v99 = vld [vmem:[%s1 + $0xf8] sm:$0xf]
  %v100 = vld [vmem:[%s1 + $0xfc] sm:$0xf]
  %v101 = vld [vmem:[%s1 + $0x100] sm:$0xf]
  %v102 = vld [vmem:[%s1 + $0x104] sm:$0xf]
  %v103 = vld [vmem:[%s1 + $0x108] sm:$0xf]
  %v104 = vld [vmem:[%s1 + $0x10c] sm:$0xf]
  %v105 = vld [vmem:[%s1 + $0x110] sm:$0xf]
  %v106 = vld [vmem:[%s1 + $0x114] sm:$0xf]
  %v107 = vld [vmem:[%s1 + $0x118] sm:$0xf]
  %v108 = vld [vmem:[%s1 + $0x11c] sm:$0xf]
  %v109 = vld [vmem:[%s1 + $0x120] sm:$0xf]
  %v110 = vld [vmem:[%s1 + $0x124] sm:$0xf]
  %v111 = vld [vmem:[%s1 + $0x128] sm:$0xf]
  %v112 = vld [vmem:[%s1 + $0x12c] sm:$0xf]
  %v113 = vld [vmem:[%s1 + $0x130] sm:$0xf]
  %v114 = vld [vmem:[%s1 + $0x134] sm:$0xf]
  %v115 = vld [vmem:[%s1 + $0x138] sm:$0xf]
  %v116 = vld [vmem:[%s1 + $0x13c] sm:$0xf]
  %v117 = vld [vmem:[%s1 + $0x140] sm:$0xf]
  %v118 = vld [vmem:[%s1 + $0x144] sm:$0xf]
  %v119 = vld [vmem:[%s1 + $0x148] sm:$0xf]
  %v120 = vld [vmem:[%s1 + $0x14c] sm:$0xf]
  %v121 = vld [vmem:[%s1 + $0x150] sm:$0xf]
  %v122 = vld [vmem:[%s1 + $0x154] sm:$0xf]
  %v123 = vld [vmem:[%s1 + $0x158] sm:$0xf]
  %v124 = vld [vmem:[%s1 + $0x15c] sm:$0xf]
  %v125 = vld [vmem:[%s1 + $0x160] sm:$0xf]
  %v126 = vld [vmem:[%s1 + $0x164] sm:$0xf]
  %v127 = vld [vmem:[%s1 + $0x168] sm:$0xf]
  %v128 = vld [vmem:[%s1 + $0x16c] sm:$0xf]
  %v129 = vld [vmem:[%s1 + $0x170] sm:$0xf]
  %v130 = vld [vmem:[%s1 + $0x174] sm:$0xf]
  %v131 = vld [vmem:[%s1 + $0x178] sm:$0xf]
  %v132 = vld [vmem:[%s1 + $0x17c] sm:$0xf]
  %v133 = vld [vmem:[%s1 + $0x180] sm:$0xf]
  %v134 = vld [vmem:[%s1 + $0x184] sm:$0xf]
  %v135 = vld [vmem:[%s1 + $0x188] sm:$0xf]
  %v136 = vld [vmem:[%s1 + $0x18c] sm:$0xf]
  %v137 = vld [vmem:[%s1 + $0x190] sm:$0xf]
  %v138 = vld [vmem:[%s1 + $0x194] sm:$0xf]
  %v139 = vld [vmem:[%s1 + $0x198] sm:$0xf]
  %v140 = vld [vmem:[%s1 + $0x19c] sm:$0xf]
  %v141 = vld [vmem:[%s1 + $0x1a0] sm:$0xf]
  %v142 = vld [vmem:[%s1 + $0x1a4] sm:$0xf]
  %v143 = vld [vmem:[%s1 + $0x1a8] sm:$0xf]
  %v144 = vld [vmem:[%s1 + $0x1ac] sm:$0xf]
  %v145 = vld [vmem:[%s1 + $0x1b0] sm:$0xf]
  %v146 = vld [vmem:[%s1 + $0x1b4] sm:$0xf]
  %v147 = vld [vmem:[%s1 + $0x1b8] sm:$0xf]
  %v148 = vld [vmem:[%s1 + $0x1bc] sm:$0xf]
  %v149 = vld [vmem:[%s1 + $0x1c0] sm:$0xf]
  %v150 = vld [vmem:[%s1 + $0x1c4] sm:$0xf]
  %v151 = vld [vmem:[%s1 + $0x1c8] sm:$0xf]
  %v152 = vld [vmem:[%s1 + $0x1cc] sm:$0xf]
  %v153 = vld [vmem:[%s1 + $0x1d0] sm:$0xf]
  %v154 = vld [vmem:[%s1 + $0x1d4] sm:$0xf]
  %v155 = vld [vmem:[%s1 + $0x1d8] sm:$0xf]
  %v156 = vld [vmem:[%s1 + $0x1dc] sm:$0xf]
  %v157 = vld [vmem:[%s1 + $0x1e0] sm:$0xf]
  %v158 = vld [vmem:[%s1 + $0x1e4] sm:$0xf]
  %v159 = vld [vmem:[%s1 + $0x1e8] sm:$0xf]
  %v160 = vld [vmem:[%s1 + $0x1ec] sm:$0xf]
  %v161 = vld [vmem:[%s1 + $0x1f0] sm:$0xf]
  %v162 = vld [vmem:[%s1 + $0x1f4] sm:$0xf]
  %v163 = vld [vmem:[%s1 + $0x1f8] sm:$0xf]
  %v164 = vld [vmem:[%s1 + $0x1fc] sm:$0xf]
  %v165 = vld [vmem:[%s2] sm:$0x1]
  %v167 = vperm.slane %v165, 0
  %v297 = vunpack.c.l.b16 %v37
  %v298 = vunpack.c.l.b16 %v38
  %v299 = vunpack.c.l.b16 %v39
  %v300 = vunpack.c.l.b16 %v40
  %v301 = vunpack.c.l.b16 %v41
  %v302 = vunpack.c.l.b16 %v42
  %v303 = vunpack.c.l.b16 %v43
  %v304 = vunpack.c.l.b16 %v44
  %v305 = vunpack.c.l.b16 %v45
  %v306 = vunpack.c.l.b16 %v46
  %v307 = vunpack.c.l.b16 %v47
  %v308 = vunpack.c.l.b16 %v48
  %v309 = vunpack.c.l.b16 %v49
  %v310 = vunpack.c.l.b16 %v50
  %v311 = vunpack.c.l.b16 %v51
  %v312 = vunpack.c.l.b16 %v52
  %v313 = vunpack.c.l.b16 %v53
  %v314 = vunpack.c.l.b16 %v54
  %v315 = vunpack.c.l.b16 %v55
  %v316 = vunpack.c.l.b16 %v56
  %v317 = vunpack.c.l.b16 %v57
  %v318 = vunpack.c.l.b16 %v58
  %v319 = vunpack.c.l.b16 %v59
  %v320 = vunpack.c.l.b16 %v60
  %v321 = vunpack.c.l.b16 %v61
  %v322 = vunpack.c.l.b16 %v62
  %v323 = vunpack.c.l.b16 %v63
  %v324 = vunpack.c.l.b16 %v64
  %v325 = vunpack.c.l.b16 %v65
  %v326 = vunpack.c.l.b16 %v66
  %v327 = vunpack.c.l.b16 %v67
  %v328 = vunpack.c.l.b16 %v68
  %v329 = vunpack.c.l.b16 %v69
  %v330 = vunpack.c.l.b16 %v70
  %v331 = vunpack.c.l.b16 %v71
  %v332 = vunpack.c.l.b16 %v72
  %v333 = vunpack.c.l.b16 %v73
  %v334 = vunpack.c.l.b16 %v74
  %v335 = vunpack.c.l.b16 %v75
  %v336 = vunpack.c.l.b16 %v76
  %v337 = vunpack.c.l.b16 %v77
  %v338 = vunpack.c.l.b16 %v78
  %v339 = vunpack.c.l.b16 %v79
  %v340 = vunpack.c.l.b16 %v80
  %v341 = vunpack.c.l.b16 %v81
  %v342 = vunpack.c.l.b16 %v82
  %v343 = vunpack.c.l.b16 %v83
  %v344 = vunpack.c.l.b16 %v84
  %v345 = vunpack.c.l.b16 %v85
  %v346 = vunpack.c.l.b16 %v86
  %v347 = vunpack.c.l.b16 %v87
  %v348 = vunpack.c.l.b16 %v88
  %v349 = vunpack.c.l.b16 %v89
  %v350 = vunpack.c.l.b16 %v90
  %v351 = vunpack.c.l.b16 %v91
  %v352 = vunpack.c.l.b16 %v92
  %v353 = vunpack.c.l.b16 %v93
  %v354 = vunpack.c.l.b16 %v94
  %v355 = vunpack.c.l.b16 %v95
  %v356 = vunpack.c.l.b16 %v96
  %v357 = vunpack.c.l.b16 %v97
  %v358 = vunpack.c.l.b16 %v98
  %v359 = vunpack.c.l.b16 %v99
  %v360 = vunpack.c.l.b16 %v100
  %v361 = vunpack.c.l.b16 %v101
  %v362 = vunpack.c.l.b16 %v102
  %v363 = vunpack.c.l.b16 %v103
  %v364 = vunpack.c.l.b16 %v104
  %v365 = vunpack.c.l.b16 %v105
  %v366 = vunpack.c.l.b16 %v106
  %v367 = vunpack.c.l.b16 %v107
  %v368 = vunpack.c.l.b16 %v108
  %v369 = vunpack.c.l.b16 %v109
  %v370 = vunpack.c.l.b16 %v110
  %v371 = vunpack.c.l.b16 %v111
  %v372 = vunpack.c.l.b16 %v112
  %v373 = vunpack.c.l.b16 %v113
  %v374 = vunpack.c.l.b16 %v114
  %v375 = vunpack.c.l.b16 %v115
  %v376 = vunpack.c.l.b16 %v116
  %v377 = vunpack.c.l.b16 %v117
  %v378 = vunpack.c.l.b16 %v118
  %v379 = vunpack.c.l.b16 %v119
  %v380 = vunpack.c.l.b16 %v120
  %v381 = vunpack.c.l.b16 %v121
  %v382 = vunpack.c.l.b16 %v122
  %v383 = vunpack.c.l.b16 %v123
  %v384 = vunpack.c.l.b16 %v124
  %v385 = vunpack.c.l.b16 %v125
  %v386 = vunpack.c.l.b16 %v126
  %v387 = vunpack.c.l.b16 %v127
  %v388 = vunpack.c.l.b16 %v128
  %v389 = vunpack.c.l.b16 %v129
  %v390 = vunpack.c.l.b16 %v130
  %v391 = vunpack.c.l.b16 %v131
  %v392 = vunpack.c.l.b16 %v132
  %v393 = vunpack.c.l.b16 %v133
  %v394 = vunpack.c.l.b16 %v134
  %v395 = vunpack.c.l.b16 %v135
  %v396 = vunpack.c.l.b16 %v136
  %v397 = vunpack.c.l.b16 %v137
  %v398 = vunpack.c.l.b16 %v138
  %v399 = vunpack.c.l.b16 %v139
  %v400 = vunpack.c.l.b16 %v140
  %v401 = vunpack.c.l.b16 %v141
  %v402 = vunpack.c.l.b16 %v142
  %v403 = vunpack.c.l.b16 %v143
  %v404 = vunpack.c.l.b16 %v144
  %v405 = vunpack.c.l.b16 %v145
  %v406 = vunpack.c.l.b16 %v146
  %v407 = vunpack.c.l.b16 %v147
  %v408 = vunpack.c.l.b16 %v148
  %v409 = vunpack.c.l.b16 %v149
  %v410 = vunpack.c.l.b16 %v150
  %v411 = vunpack.c.l.b16 %v151
  %v412 = vunpack.c.l.b16 %v152
  %v413 = vunpack.c.l.b16 %v153
  %v414 = vunpack.c.l.b16 %v154
  %v415 = vunpack.c.l.b16 %v155
  %v416 = vunpack.c.l.b16 %v156
  %v417 = vunpack.c.l.b16 %v157
  %v418 = vunpack.c.l.b16 %v158
  %v419 = vunpack.c.l.b16 %v159
  %v420 = vunpack.c.l.b16 %v160
  %v421 = vunpack.c.l.b16 %v161
  %v422 = vunpack.c.l.b16 %v162
  %v423 = vunpack.c.l.b16 %v163
  %v424 = vunpack.c.l.b16 %v164
  %v425 = vpack.c.b16 %v298, %v297
  %v426 = vpack.c.b16 %v300, %v299
  %v427 = vpack.c.b16 %v302, %v301
  %v428 = vpack.c.b16 %v304, %v303
  %v429 = vpack.c.b16 %v306, %v305
  %v430 = vpack.c.b16 %v308, %v307
  %v431 = vpack.c.b16 %v310, %v309
  %v432 = vpack.c.b16 %v312, %v311
  %v433 = vpack.c.b16 %v314, %v313
  %v434 = vpack.c.b16 %v316, %v315
  %v435 = vpack.c.b16 %v318, %v317
  %v436 = vpack.c.b16 %v320, %v319
  %v437 = vpack.c.b16 %v322, %v321
  %v438 = vpack.c.b16 %v324, %v323
  %v439 = vpack.c.b16 %v326, %v325
  %v440 = vpack.c.b16 %v328, %v327
  %v441 = vpack.c.b16 %v330, %v329
  %v442 = vpack.c.b16 %v332, %v331
  %v443 = vpack.c.b16 %v334, %v333
  %v444 = vpack.c.b16 %v336, %v335
  %v445 = vpack.c.b16 %v338, %v337
  %v446 = vpack.c.b16 %v340, %v339
  %v447 = vpack.c.b16 %v342, %v341
  %v448 = vpack.c.b16 %v344, %v343
  %v449 = vpack.c.b16 %v346, %v345
  %v450 = vpack.c.b16 %v348, %v347
  %v451 = vpack.c.b16 %v350, %v349
  %v452 = vpack.c.b16 %v352, %v351
  %v453 = vpack.c.b16 %v354, %v353
  %v454 = vpack.c.b16 %v356, %v355
  %v455 = vpack.c.b16 %v358, %v357
  %v456 = vpack.c.b16 %v360, %v359
  %v457 = vpack.c.b16 %v362, %v361
  %v458 = vpack.c.b16 %v364, %v363
  %v459 = vpack.c.b16 %v366, %v365
  %v460 = vpack.c.b16 %v368, %v367
  %v461 = vpack.c.b16 %v370, %v369
  %v462 = vpack.c.b16 %v372, %v371
  %v463 = vpack.c.b16 %v374, %v373
  %v464 = vpack.c.b16 %v376, %v375
  %v465 = vpack.c.b16 %v378, %v377
  %v466 = vpack.c.b16 %v380, %v379
  %v467 = vpack.c.b16 %v382, %v381
  %v468 = vpack.c.b16 %v384, %v383
  %v469 = vpack.c.b16 %v386, %v385
  %v470 = vpack.c.b16 %v388, %v387
  %v471 = vpack.c.b16 %v390, %v389
  %v472 = vpack.c.b16 %v392, %v391
  %v473 = vpack.c.b16 %v394, %v393
  %v474 = vpack.c.b16 %v396, %v395
  %v475 = vpack.c.b16 %v398, %v397
  %v476 = vpack.c.b16 %v400, %v399
  %v477 = vpack.c.b16 %v402, %v401
  %v478 = vpack.c.b16 %v404, %v403
  %v479 = vpack.c.b16 %v406, %v405
  %v480 = vpack.c.b16 %v408, %v407
  %v481 = vpack.c.b16 %v410, %v409
  %v482 = vpack.c.b16 %v412, %v411
  %v483 = vpack.c.b16 %v414, %v413
  %v484 = vpack.c.b16 %v416, %v415
  %v485 = vpack.c.b16 %v418, %v417
  %v486 = vpack.c.b16 %v420, %v419
  %v487 = vpack.c.b16 %v422, %v421
  %v488 = vpack.c.b16 %v424, %v423
  %553 = vmatpush.bf16.msra.mxu0 %v432
  %554 = vmatpush.bf16.msra.mxu0 %v431
  %555 = vmatpush.bf16.msra.mxu0 %v430
  %556 = vmatpush.bf16.msra.mxu0 %v429
  %557 = vmatpush.bf16.msra.mxu0 %v428
  %558 = vmatpush.bf16.msra.mxu0 %v427
  %559 = vmatpush.bf16.msra.mxu0 %v426
  %560 = vmatpush.bf16.msra.mxu0 %v425
  %561 = vmatmul.bf16.gmra.mxu0 %v29
  %v562 = vpop.f32.mrf.mxu0
  %v563 = vadd.f32 %v167, %v562
  %v564 = vpop.f32.mrf.mxu0
  %565 = vdwg.mxu0
  %566 = vmatpush.bf16.msra.mxu0 %v440
  %567 = vmatpush.bf16.msra.mxu0 %v439
  %568 = vmatpush.bf16.msra.mxu0 %v438
  %569 = vmatpush.bf16.msra.mxu0 %v437
  %570 = vmatpush.bf16.msra.mxu0 %v436
  %571 = vmatpush.bf16.msra.mxu0 %v435
  %572 = vmatpush.bf16.msra.mxu0 %v434
  %573 = vmatpush.bf16.msra.mxu0 %v433
  %574 = vmatmul.bf16.gmra.mxu0 %v30
  %v575 = vpop.f32.mrf.mxu0
  %v576 = vadd.f32 %v563, %v575
  %v577 = vpop.f32.mrf.mxu0
  %578 = vdwg.mxu0
  %579 = vmatpush.bf16.msra.mxu0 %v448
  %580 = vmatpush.bf16.msra.mxu0 %v447
  %581 = vmatpush.bf16.msra.mxu0 %v446
  %582 = vmatpush.bf16.msra.mxu0 %v445
  %583 = vmatpush.bf16.msra.mxu0 %v444
  %584 = vmatpush.bf16.msra.mxu0 %v443
  %585 = vmatpush.bf16.msra.mxu0 %v442
  %586 = vmatpush.bf16.msra.mxu0 %v441
  %587 = vmatmul.bf16.gmra.mxu0 %v31
  %v588 = vpop.f32.mrf.mxu0
  %v589 = vadd.f32 %v576, %v588
  %v590 = vpop.f32.mrf.mxu0
  %591 = vdwg.mxu0
  %592 = vmatpush.bf16.msra.mxu0 %v456
  %593 = vmatpush.bf16.msra.mxu0 %v455
  %594 = vmatpush.bf16.msra.mxu0 %v454
  %595 = vmatpush.bf16.msra.mxu0 %v453
  %596 = vmatpush.bf16.msra.mxu0 %v452
  %597 = vmatpush.bf16.msra.mxu0 %v451
  %598 = vmatpush.bf16.msra.mxu0 %v450
  %599 = vmatpush.bf16.msra.mxu0 %v449
  %600 = vmatmul.bf16.gmra.mxu0 %v32
  %v601 = vpop.f32.mrf.mxu0
  %v602 = vadd.f32 %v589, %v601
  %v603 = vpop.f32.mrf.mxu0
  %604 = vdwg.mxu0
  %605 = vmatpush.bf16.msra.mxu0 %v464
  %606 = vmatpush.bf16.msra.mxu0 %v463
  %607 = vmatpush.bf16.msra.mxu0 %v462
  %608 = vmatpush.bf16.msra.mxu0 %v461
  %609 = vmatpush.bf16.msra.mxu0 %v460
  %610 = vmatpush.bf16.msra.mxu0 %v459
  %611 = vmatpush.bf16.msra.mxu0 %v458
  %612 = vmatpush.bf16.msra.mxu0 %v457
  %613 = vmatmul.bf16.gmra.mxu0 %v33
  %v614 = vpop.f32.mrf.mxu0
  %v615 = vadd.f32 %v602, %v614
  %v616 = vpop.f32.mrf.mxu0
  %617 = vdwg.mxu0
  %618 = vmatpush.bf16.msra.mxu0 %v472
  %619 = vmatpush.bf16.msra.mxu0 %v471
  %620 = vmatpush.bf16.msra.mxu0 %v470
  %621 = vmatpush.bf16.msra.mxu0 %v469
  %622 = vmatpush.bf16.msra.mxu0 %v468
  %623 = vmatpush.bf16.msra.mxu0 %v467
  %624 = vmatpush.bf16.msra.mxu0 %v466
  %625 = vmatpush.bf16.msra.mxu0 %v465
  %626 = vmatmul.bf16.gmra.mxu0 %v34
  %v627 = vpop.f32.mrf.mxu0
  %v628 = vadd.f32 %v615, %v627
  %v629 = vpop.f32.mrf.mxu0
  %630 = vdwg.mxu0
  %631 = vmatpush.bf16.msra.mxu0 %v480
  %632 = vmatpush.bf16.msra.mxu0 %v479
  %633 = vmatpush.bf16.msra.mxu0 %v478
  %634 = vmatpush.bf16.msra.mxu0 %v477
  %635 = vmatpush.bf16.msra.mxu0 %v476
  %636 = vmatpush.bf16.msra.mxu0 %v475
  %637 = vmatpush.bf16.msra.mxu0 %v474
  %638 = vmatpush.bf16.msra.mxu0 %v473
  %639 = vmatmul.bf16.gmra.mxu0 %v35
  %v640 = vpop.f32.mrf.mxu0
  %v641 = vadd.f32 %v628, %v640
  %v642 = vpop.f32.mrf.mxu0
  %643 = vdwg.mxu0
  %644 = vmatpush.bf16.msra.mxu0 %v488
  %645 = vmatpush.bf16.msra.mxu0 %v487
  %646 = vmatpush.bf16.msra.mxu0 %v486
  %647 = vmatpush.bf16.msra.mxu0 %v485
  %648 = vmatpush.bf16.msra.mxu0 %v484
  %649 = vmatpush.bf16.msra.mxu0 %v483
  %650 = vmatpush.bf16.msra.mxu0 %v482
  %651 = vmatpush.bf16.msra.mxu0 %v481
  %652 = vmatmul.bf16.gmra.mxu0 %v36
  %v653 = vpop.f32.mrf.mxu0
  %v654 = vadd.f32 %v641, %v653
  %v655 = vpop.f32.mrf.mxu0
  %656 = vdwg.mxu0
  %v657 = vmax.f32 %v654, 0.0
  %v658 = vpack.c.bf16 %v657, %v657
  %v659 = vld [vmem:[%s3] sm:$0xf]
  %v660 = vld [vmem:[%s3 + $0x4] sm:$0xf]
  %v661 = vld [vmem:[%s3 + $0x8] sm:$0xf]
  %v662 = vld [vmem:[%s3 + $0xc] sm:$0xf]
  %v663 = vld [vmem:[%s4] sm:$0x1]
  %v665 = vperm.slane %v663, 0
  %v671 = vunpack.c.l.b16 %v659
  %v672 = vunpack.c.l.b16 %v660
  %v673 = vunpack.c.l.b16 %v661
  %v674 = vunpack.c.l.b16 %v662
  %v675 = vpack.c.b16 %v672, %v671
  %v676 = vpack.c.b16 %v674, %v673
  %vm679 = vcmask 261120
  %v681 = vsel %vm679, %v658, 0
  %683 = vmatpush.bf16.msra.mxu0 0
  %684 = vmatpush.bf16.msra.mxu0 0
  %685 = vmatpush.bf16.msra.mxu0 0
  %686 = vmatpush.bf16.msra.mxu0 0
  %687 = vmatpush.bf16.msra.mxu0 0
  %688 = vmatpush.bf16.msra.mxu0 0
  %689 = vmatpush.bf16.msra.mxu0 %v676
  %690 = vmatpush.bf16.msra.mxu0 %v675
  %691 = vmatmul.bf16.gmra.mxu0 %v681
  %v692 = vpop.f32.mrf.mxu0
  %v693 = vadd.f32 %v665, %v692
  %v694 = vpop.f32.mrf.mxu0
  %695 = vdwg.mxu0
  %696 = vst [vmem:[%s5] sm:$0xff] %v693
  // Predicated region
  $region22: #{normalize_model.1} parent=0 // pred_check
    _
  $region23: #{normalize_model.1} parent=0 // pred_check_branch
    %698 = sbr.rel (0) target = $region25
  $region24: #{normalize_model.1} parent=0 // pred_region
    _
  $region25: #{normalize_model.1} parent=0 // pred_fallthru
    _
  // Predicated region
  $region26: #{normalize_model.1} parent=0 // pred_check
    _
  $region27: #{normalize_model.1} parent=0 // pred_check_branch
    %700 = sbr.rel (0) target = $region29
  $region28: #{normalize_model.1} parent=0 // pred_region
    _
  $region29: #{normalize_model.1} parent=0 // pred_fallthru
    _

</llo_original>
